<compile_context>
chip_gen: v7x
topology: tpu7x:2x2x1
jax: 0.10.0
libtpu: 0.0.40
codegen_flags: <defaults>
</compile_context>

<pallas_src>
import functools

import jax
import jax.numpy as jnp
from jax.experimental import pallas as pl
from jax.experimental.pallas import tpu as pltpu

MU = 1.0      # speech distortion constant (module default)
RANK = 1      # low-rank approximation of the target SCM (module default)

# Tile targets: F tile on sublanes, 2*T tile (interleaved Re/Im) on lanes.
_F_TILE = 64
_T_TILE = 1024            # frames per tile -> 2048 interleaved f32 lanes
_VMEM_CAP_BYTES = 48 * 1024 * 1024


def _round_up(x, m):
    return ((x + m - 1) // m) * m


@functools.lru_cache(maxsize=None)
def _roll_plus_one_needs_negative_shift():
    """One-off probe of pltpu.roll's direction convention on the real backend.

    Returns True when pltpu.roll follows np.roll semantics
    (result[i] = x[(i - shift) % n]), in which case reading x[i + 1]
    requires an effective shift of -1 (== n - 1).
    """
    x = jnp.broadcast_to(jnp.arange(128, dtype=jnp.float32), (8, 128))

    def probe(x_ref, o_ref):
        o_ref[...] = pltpu.roll(x_ref[...], 1, 1)

    out = pl.pallas_call(
        probe, out_shape=jax.ShapeDtypeStruct((8, 128), jnp.float32))(x)
    return float(out[0, 0]) == 127.0


# ----------------------------------------------------------------------------
# Pallas kernel: apply the complex beamforming vector to one (F_t, 2*T_t) tile
# of the lane-interleaved mixture.
#   y[f, t] = sum_m conj(w[m, f]) * x[m, f, t]
# With x and y lane-interleaved (even lane = Re, odd lane = Im) and
#   a = sum_m Re(w_m) * x_m ,  b = sum_m Im(w_m) * x_m      (both interleaved)
# the result is
#   y[2t]   = a[2t]   + b[2t+1]
#   y[2t+1] = a[2t+1] - b[2t]
# i.e. y = a + (+1/-1 on even/odd lanes) * pairwise-lane-swap(b).  The swap
# runs on the XLU (pltpu.roll + select), which has full slack in this
# HBM-bound kernel.  The MXU is deliberately not used: the contraction dim is
# only M=4-8 mics and the op is memory-bound.
# ----------------------------------------------------------------------------
def _bf_apply_kernel(w_ref, x_ref, y_ref, *, shift_up, shift_down):
    # w_ref : (F_t, 2M)      f32, [:, :M] = Re(w), [:, M:] = Im(w)
    # x_ref : (M, F_t, 2T_t) f32, lane-interleaved mixture
    # y_ref : (F_t, 2T_t)    f32, lane-interleaved output
    num_mics = x_ref.shape[0]
    f_t, t2 = y_ref.shape
    w = w_ref[...]
    a = None
    b = None
    for m in range(num_mics):                      # static, small -> unrolled
        xm = x_ref[m]                              # (F_t, 2T_t)
        wr = w[:, m:m + 1]                         # (F_t, 1), lane-broadcast
        wi = w[:, num_mics + m:num_mics + m + 1]
        a = wr * xm if a is None else a + wr * xm
        b = wi * xm if b is None else b + wi * xm
    up = pltpu.roll(b, shift_up, 1)                # up[l]   = b[l + 1]
    down = pltpu.roll(b, shift_down, 1)            # down[l] = b[l - 1]
    lane = jax.lax.broadcasted_iota(jnp.int32, (f_t, t2), 1)
    even = (lane & 1) == 0
    y_ref[...] = a + jnp.where(even, up, -down)


def apply_beamforming_vector_pallas(bf_vect, mix, f_tile=_F_TILE, t_tile=_T_TILE):
    """bf_vect: (B, M, F) complex64, mix: (B, M, F, T) complex64 -> (B, F, T) complex64."""
    B, M, F, T = mix.shape

    # Lane axis is padded (only) up to the 128-lane grain so pltpu.roll always
    # sees a 128-aligned lane extent; this adds <= 63 zero frames and fuses
    # into the interleaving pass below.  F tiles are left ragged for Pallas'
    # masked boundary handling (no mix-sized padding).
    Tp = _round_up(T, 64)
    T2p = 2 * Tp
    f_t = min(f_tile, F)                  # block second-minor: mult of 8 or == F
    t2_t = min(2 * t_tile, T2p)           # block minor: multiple of 128
    n_f = pl.cdiv(F, f_t)
    n_t = pl.cdiv(T2p, t2_t)

    # Lane-interleaved real/imag view of the mixture, (B, M, F, 2*Tp) f32 with
    # x[..., 2t] = Re and x[..., 2t+1] = Im, built in ONE fused XLA pass.
    # TODO(synk): a true zero-copy complex64->f32 view is not expressible
    # (XLA BitcastConvert rejects complex<->real), so one conversion pass over
    # mix remains.
    if Tp != T:
        mix = jnp.pad(mix, ((0, 0), (0, 0), (0, 0), (0, Tp - T)))
    x_int = jnp.stack(
        (jnp.real(mix).astype(jnp.float32), jnp.imag(mix).astype(jnp.float32)),
        axis=-1).reshape(B, M, F, T2p)

    # Tiny beamforming weights in one array -> one DMA stream per grid step.
    w_t = jnp.transpose(bf_vect, (0, 2, 1))                       # (B, F, M)
    w_cat = jnp.concatenate(
        (jnp.real(w_t).astype(jnp.float32), jnp.imag(w_t).astype(jnp.float32)),
        axis=-1)                                                  # (B, F, 2M)

    # Fold batch and F tiles into one parallel axis (keeps both v7x TensorCores
    # busy for small B / few F tiles); T tiles innermost so the weight block is
    # DMA'd once per (batch, F-tile) and reused across T tiles.
    grid = (B * n_f, n_t)
    w_spec = pl.BlockSpec((None, f_t, 2 * M),
                          lambda bf, ti: (bf // n_f, bf % n_f, 0))
    x_spec = pl.BlockSpec((None, M, f_t, t2_t),
                          lambda bf, ti: (bf // n_f, 0, bf % n_f, ti))
    y_spec = pl.BlockSpec((None, f_t, t2_t),
                          lambda bf, ti: (bf // n_f, bf % n_f, ti))

    if _roll_plus_one_needs_negative_shift():
        shift_up, shift_down = t2_t - 1, 1
    else:
        shift_up, shift_down = 1, t2_t - 1
    kernel = functools.partial(_bf_apply_kernel,
                               shift_up=shift_up, shift_down=shift_down)

    # VMEM budget: double-buffered blocks + in-kernel full-tile temporaries,
    # with headroom; well under v7x's 64 MiB physical VMEM per TensorCore.
    tile_bytes = 4 * f_t * t2_t
    block_bytes = 2 * ((M + 1) * tile_bytes + 4 * f_t * 2 * M)
    vmem_limit = int(min(block_bytes + 10 * tile_bytes + (8 << 20),
                         _VMEM_CAP_BYTES))

    cost = pl.CostEstimate(
        flops=8 * B * M * F * T,
        transcendentals=0,
        bytes_accessed=4 * (B * M * F * T2p + B * F * T2p + 2 * B * F * M),
    )

    y_int = pl.pallas_call(
        kernel,
        out_shape=jax.ShapeDtypeStruct((B, F, T2p), jnp.float32),
        grid=grid,
        in_specs=[w_spec, x_spec],
        out_specs=y_spec,
        compiler_params=pltpu.CompilerParams(
            dimension_semantics=("parallel", "parallel"),
            vmem_limit_bytes=vmem_limit),
        cost_estimate=cost,
    )(w_cat, x_int)

    # Interleaved f32 -> complex64 in one fused slice+complex pass (the output
    # is 1/M the size of mix, so this pass is minor).
    y4 = y_int.reshape(B, F, Tp, 2)
    return jax.lax.complex(y4[:, :, :T, 0], y4[:, :, :T, 1])


# ----------------------------------------------------------------------------
# GEVD beamforming-vector computation (tiny mics x mics linalg) -- plain JAX.
# TODO(synk): cholesky / eigh / inv have no clean Pallas equivalent on TPU;
# kept in XLA, and in complex64 rather than the module's float64 promotion
# (TPU f64 is emulated / slow).
# ----------------------------------------------------------------------------
def _batch_trace(x):
    return jnp.trace(x, axis1=-2, axis2=-1)


def _condition_scm(x, eps=1e-6):
    m = x.shape[-1]
    scale = eps * _batch_trace(x)[..., None, None] / m
    eye = jnp.eye(m, dtype=x.dtype)
    return (x + eye * scale) / (1 + eps)


def _stable_cholesky(b, eps=1e-6):
    L = jnp.linalg.cholesky(b)
    bad = jnp.any(jnp.isnan(jnp.real(L)) | jnp.isnan(jnp.imag(L)),
                  axis=(-2, -1), keepdims=True)
    L_cond = jnp.linalg.cholesky(_condition_scm(b, eps))
    return jnp.where(bad, L_cond, L)


def _generalized_eigenvalue_decomposition(a, b):
    L = _stable_cholesky(b)
    inv_L = jnp.linalg.inv(L)
    inv_L_H = jnp.conj(jnp.swapaxes(inv_L, -1, -2))
    cmat = inv_L @ a @ inv_L_H
    e_val, e_vec = jnp.linalg.eigh(cmat)           # ascending, like torch.symeig
    e_vec = inv_L_H @ e_vec
    return e_val, e_vec


def compute_beamforming_vector(target_scm, noise_scm, mu=MU, rank=RANK):
    """target_scm / noise_scm: (B, M, M, F) complex64 -> bf_vect (B, M, F) complex64."""
    a = jnp.transpose(target_scm, (0, 3, 1, 2))    # (B, F, M, M)
    b = jnp.transpose(noise_scm, (0, 3, 1, 2))
    e_val, e_vec = _generalized_eigenvalue_decomposition(a, b)

    eps = jnp.finfo(e_val.dtype).eps
    e_val = jnp.clip(e_val, eps, 1.0e6)
    e_val = e_val[..., ::-1]                       # descending
    e_vec = e_vec[..., ::-1]
    m = e_val.shape[-1]
    if rank:
        e_val = e_val * (jnp.arange(m) < rank).astype(e_val.dtype)

    lam = e_val[..., :, None] * jnp.eye(m, dtype=e_val.dtype)        # diag_embed
    ev_plus_mu = lam + mu * jnp.eye(m, dtype=lam.dtype)
    ct = e_vec.dtype
    bf_mat = e_vec @ lam.astype(ct) @ jnp.linalg.inv(e_vec @ ev_plus_mu.astype(ct))
    bf_vect = bf_mat[..., 0]                       # (B, F, M)
    return jnp.transpose(bf_vect, (0, 2, 1))       # (B, M, F)


def gevd_beamformer_forward(mix, target_scm, noise_scm, mu=MU, rank=RANK):
    """mix: (B, M, F, T) complex; SCMs: (B, M, M, F) complex -> (B, F, T) complex64."""
    bf_vect = compute_beamforming_vector(target_scm, noise_scm, mu=mu, rank=rank)
    return apply_beamforming_vector_pallas(bf_vect, mix)


# ----------------------------------------------------------------------------
# Deterministic example + run.
# ----------------------------------------------------------------------------
def _random_complex(key, shape):
    kr, ki = jax.random.split(key)
    return (jax.random.normal(kr, shape, dtype=jnp.float32)
            + 1j * jax.random.normal(ki, shape, dtype=jnp.float32)).astype(jnp.complex64)


def _make_scm(key, batch, mics, freqs, snapshots=8, jitter=1e-2):
    """Hermitian PD SCM of shape (batch, mics, mics, freqs)."""
    r = _random_complex(key, (batch, freqs, mics, snapshots))
    scm = r @ jnp.conj(jnp.swapaxes(r, -1, -2)) / snapshots
    scm = scm + jitter * jnp.eye(mics, dtype=scm.dtype)
    return jnp.transpose(scm, (0, 2, 3, 1))       # (B, M, M, F)


if __name__ == "__main__":
    # Non-multiple-of-(8,128) freqs/frames so the ragged-tile / lane-pad path
    # is exercised.
    batch, mics, freqs, frames = 2, 4, 13, 50
    key = jax.random.PRNGKey(0)
    k_mix, k_tgt, k_noi = jax.random.split(key, 3)

    mix = _random_complex(k_mix, (batch, mics, freqs, frames))
    target_scm = _make_scm(k_tgt, batch, mics, freqs)
    noise_scm = _make_scm(k_noi, batch, mics, freqs)

    out = gevd_beamformer_forward(mix, target_scm, noise_scm)
    out = jax.block_until_ready(out)

    # Sanity: Pallas beamforming application matches a pure-JAX einsum reference.
    bf_vect = compute_beamforming_vector(target_scm, noise_scm)
    ref = jnp.einsum('bmf,bmft->bft', jnp.conj(bf_vect), mix)
    assert out.shape == (batch, freqs, frames)
    assert jnp.allclose(out, ref, atol=1e-3, rtol=1e-3)

    print("KERNEL_OK")
</pallas_src>

<mosaic_0001>
module attributes {stable_mosaic.version = 11 : i64} {
  func.func @probe(%arg0: memref<8x128xf32, #tpu.memory_space<vmem>>, %arg1: memref<8x128xf32, #tpu.memory_space<vmem>>) attributes {dimension_semantics = [], scalar_prefetch = 0 : i64, scratch_operands = 0 : i64, tpu.core_type = #tpu.core_type<tc>} {
    %c0 = arith.constant 0 : index
    %c0_0 = arith.constant 0 : index
    %0 = vector.load %arg0[%c0, %c0_0] : memref<8x128xf32, #tpu.memory_space<vmem>>, vector<8x128xf32>
    %c1_i32 = arith.constant 1 : i32
    %1 = tpu.dynamic_rotate %0 by %c1_i32 dim 1 : vector<8x128xf32>, i32 -> vector<8x128xf32>
    %c0_1 = arith.constant 0 : index
    %c0_2 = arith.constant 0 : index
    %2 = vector.load %arg1[%c0_1, %c0_2] : memref<8x128xf32, #tpu.memory_space<vmem>>, vector<8x128xf32>
    tpu.vector_store %arg1[%c0_1, %c0_2], %1 {strides = array<i32>} : memref<8x128xf32, #tpu.memory_space<vmem>>, vector<8x128xf32>,
    return
  }
}

</mosaic_0001>

<llo_original>
// kernel: tpu_custom_call.1
$region0: #{tpu_custom_call.1}
  #allocation0 [shape = 'u32[]', space=smem, size = 0x4, offset = 0x4, fixed_abs, tag = 'smem constant byte address 0x4 - core index']
  #allocation1 [shape = 'u32[144,128]{1,0:T(1,128)}', space=vmem, size = 0x12000, scoped, tag = 'internal scratch']
  %s0 = inlined_call_operand.hbm [shape: f32[8,128], index: 0, kind: input, shape index: {}]
  %s1 = inlined_call_operand.hbm [shape: f32[8,128], index: 1, kind: output, shape index: {}]
  %s2 = sld [smem:[#allocation0]]
  $region18: #{tpu_custom_call.1} parent=0
    _
  %s4 = ssub.s32 1, %s2
  %s5 = scalar_select 0, %s4, %s2
  $region1: #{tpu_custom_call.1} parent=0
    #allocation2 [shape = 'u8[4096]{0}', space=vmem, size = 0x1000, scoped, tag = 'input window, operand 0, single buffered']
    #allocation3 [shape = 's32[1]{0}', space=sflag, size = 0x4, scoped, tag = 'scoped memory for tpu_custom_call.1']
    #allocation4 [shape = 's32[1]{0}', space=sflag, size = 0x4, scoped, tag = 'scoped memory for tpu_custom_call.1']
    #allocation5 [shape = 'u8[4096]{0}', space=vmem, size = 0x1000, scoped, tag = 'output window, operand 0, single buffered']
    %6 = vsyncpa [#allocation3], 0
    %7 = vsyncpa [#allocation4], 0
    // Predicated region
    $region2: #{tpu_custom_call.1} parent=1 // pred_check
      _
    $region3: #{tpu_custom_call.1} parent=1 // pred_check_branch
      %9 = sbr.rel (0) target = $region5
    $region4: #{tpu_custom_call.1} parent=1 // pred_region
      %s11 = ssub.s32 128, 128
      %12 = vsyncadd [#allocation3], %s11
      %s14 = sshll.u32 [#allocation2], 4
      %s15 = int_to_ptr.vmem [resolvable:$true] %s14
      %17 = dma.hbm_to_vmem [thread:$0]  %s0, 128, %s15, [#allocation3]
    $region5: #{tpu_custom_call.1} parent=1 // pred_fallthru
      _
    // Predicated region
    $region6: #{tpu_custom_call.1} parent=1 // pred_check
      _
    $region7: #{tpu_custom_call.1} parent=1 // pred_check_branch
      %19 = sbr.rel (0) target = $region9
    $region8: #{tpu_custom_call.1} parent=1 // pred_region
      %20 = dma.done [#allocation3], 128
    $region9: #{tpu_custom_call.1} parent=1 // pred_fallthru
      _
    %v21 = vld [vmem:[#allocation2] sm:$0xff]
    %22 = vrot.lane.b32.xlu0 %v21, 1
    %v23 = vpop.permute.xlu0 %22
    %24 = vst [vmem:[#allocation5] sm:$0xff] %v23
    // Predicated region
    $region10: #{tpu_custom_call.1} parent=1 // pred_check
      _
    $region11: #{tpu_custom_call.1} parent=1 // pred_check_branch
      %26 = sbr.rel (0) target = $region13
    $region12: #{tpu_custom_call.1} parent=1 // pred_region
      %s28 = ssub.s32 128, 128
      %29 = vsyncadd [#allocation4], %s28
      %s31 = sshll.u32 [#allocation5], 4
      %s32 = int_to_ptr.vmem [resolvable:$true] %s31
      %34 = dma.vmem_to_hbm [thread:$0]  %s32, 128, %s1, [#allocation4]
    $region13: #{tpu_custom_call.1} parent=1 // pred_fallthru
      _
    // Predicated region
    $region14: #{tpu_custom_call.1} parent=1 // pred_check
      _
    $region15: #{tpu_custom_call.1} parent=1 // pred_check_branch
      %36 = sbr.rel (0) target = $region17
    $region16: #{tpu_custom_call.1} parent=1 // pred_region
      %37 = dma.done [#allocation4], 128
    $region17: #{tpu_custom_call.1} parent=1 // pred_fallthru
      _
    %38 = vsyncpa [#allocation3], 1
    %39 = vsyncpa [#allocation4], 1

</llo_original>
